<compile_context>
chip_gen: v7x
topology: tpu7x:2x2x1
jax: 0.10.0
libtpu: 0.0.40
codegen_flags: <defaults>
</compile_context>

<pallas_src>
import functools
import math

import jax
import jax.numpy as jnp
import numpy as np
from jax.experimental import pallas as pl
from jax.experimental.pallas import tpu as pltpu


def _mhsa_kernel(x_ref, w_in_ref, b_in_ref, w_out_ref, b_out_ref,
                 gamma_ref, beta_ref, o_ref, qkv_ref, ctx_ref, *, num_heads):
    """Fused MHSA + residual + LayerNorm for one batch block.

    x_ref     : (B, L, E)   f32
    w_in_ref  : (E, 3E)     bf16  pre-transposed [Wq|Wk|Wv], Wq pre-scaled by 1/sqrt(D)
    b_in_ref  : (1, 3E)     f32   packed [bq|bk|bv], bq pre-scaled
    w_out_ref : (E, E)      bf16  pre-transposed out_proj.weight (contraction-ready)
    b_out_ref : (1, E)      f32
    gamma/beta: (1, E)      f32   LayerNorm affine
    o_ref     : (B, L, E)
    qkv_ref   : (B*L, 3E)   f32   VMEM scratch (fused QKV projection)
    ctx_ref   : (B*L, E)    bf16  VMEM scratch (per-head context accumulator)
    """
    B, L, E = x_ref.shape
    D = E // num_heads
    BL = B * L

    # --- Fused QKV projection: one (BL,E)x(E,3E) bf16 MXU pass, f32 accumulate,
    # result parked in VMEM scratch so nothing large stays live in vregs.
    x_bf = x_ref[...].reshape(BL, E).astype(jnp.bfloat16)
    qkv_ref[...] = jnp.dot(x_bf, w_in_ref[...],
                           preferred_element_type=jnp.float32) + b_in_ref[...]

    # --- Per-head attention.  Each head's context goes straight into the bf16
    # scratch at its lane slice; the output projection then runs once with K=E.
    for h in range(num_heads):
        lo = h * D
        qh = qkv_ref[:, lo:lo + D].astype(jnp.bfloat16).reshape(B, L, D)          # pre-scaled
        kh = qkv_ref[:, E + lo:E + lo + D].astype(jnp.bfloat16).reshape(B, L, D)
        vh = qkv_ref[:, 2 * E + lo:2 * E + lo + D].astype(jnp.bfloat16).reshape(B, L, D)

        # q @ k^T without an explicit transpose (contract last dims).
        s = jnp.einsum("bld,bmd->blm", qh, kh,
                       preferred_element_type=jnp.float32)                         # (B, L, L)
        s = s - jnp.max(s, axis=-1, keepdims=True)
        p = jnp.exp(s)
        p = p * pl.reciprocal(jnp.sum(p, axis=-1, keepdims=True), approx=False)

        oh = jnp.einsum("blm,bmd->bld", p.astype(jnp.bfloat16), vh,
                        preferred_element_type=jnp.float32)                        # (B, L, D)
        ctx_ref[:, lo:lo + D] = oh.reshape(BL, D).astype(jnp.bfloat16)

    # --- Fused output projection: ONE (BL, E) x (E, E) bf16 matmul, K = E.
    attn = jnp.dot(ctx_ref[...], w_out_ref[...],
                   preferred_element_type=jnp.float32)                             # (BL, E)

    # --- Residual + LayerNorm (eps = 1e-5, nn.LayerNorm default), all in f32.
    # x is re-read from the resident VMEM block (cheap vld, no long live range).
    y = x_ref[...].reshape(BL, E) + attn + b_out_ref[...]
    mu = jnp.mean(y, axis=-1, keepdims=True)
    var = jnp.mean((y - mu) ** 2, axis=-1, keepdims=True)
    normed = (y - mu) * jax.lax.rsqrt(var + 1e-5)
    out = normed * gamma_ref[...] + beta_ref[...]
    o_ref[...] = out.reshape(B, L, E).astype(o_ref.dtype)


def _vmem_capacity_bytes():
    """Physical per-core VMEM (64 MiB on v7x, 128 MiB on v5e/v6e)."""
    try:
        return int(pltpu.get_tpu_info().vmem_capacity_bytes)
    except Exception:
        return 64 << 20   # conservative (v7x) default if the query is unavailable


def _block_work_bytes(blk, seq_len, embed_dim, head_dim):
    """Approximate per-grid-step VMEM working set (bytes) for one batch block."""
    bl = blk * seq_len
    io = 4 * bl * embed_dim * 4                               # x + out blocks, 2x buffered, f32
    scratch = bl * 3 * embed_dim * 4 + bl * embed_dim * 2     # qkv f32 + ctx bf16 scratch
    head = (3 * bl * head_dim * 2                             # qh/kh/vh bf16
            + 2 * bl * seq_len * 4                            # scores + probs f32 (B*L*L)
            + bl * head_dim * 4)                              # per-head context f32
    tail = 4 * bl * embed_dim * 4 + bl * embed_dim * 2        # attn/x2/y/normed f32 + bf16 x cast
    return io + scratch + head + tail


def _auto_batch_block(n, seq_len, embed_dim, head_dim, budget_bytes):
    """Pick batch elements per grid step.

    Preference order: even grid length (both v7x TensorCores busy on every pair
    of steps) > grid length >= 2 > largest block whose working set fits the
    per-generation VMEM budget (amortizes the ~0.35us per-step overhead and
    keeps the matmul M dimension tall).
    """
    best_key, best_blk = None, 1
    for blk in range(1, n + 1):
        if n % blk:
            continue
        if blk > 1 and _block_work_bytes(blk, seq_len, embed_dim, head_dim) > budget_bytes:
            continue
        g = n // blk
        key = ((g % 2 == 0), g >= 2, blk)
        if best_key is None or key > best_key:
            best_key, best_blk = key, blk
    return best_blk


def mhsa_block(x_nle, params, *, num_heads, batch_block=None):
    """Batch-first MHSA block: x_nle is (N, L, E) float32.

    Matches PyTorch `MultiheadSelfAttentionBlock` (eval mode) applied to
    x = x_nle.transpose(0, 1) in its native (L, N, E) layout.  Batch-first is
    used at this boundary so no extra HBM transpose pass is paid per call.
    """
    N, L, E = x_nle.shape
    assert E % num_heads == 0
    D = E // num_heads
    scale = 1.0 / math.sqrt(D)

    # Host-side prep (fused/const-folded by XLA under jit):
    #  * transpose weights so the kernel never transposes,
    #  * fold the 1/sqrt(D) query scale into Wq / bq,
    #  * cast weight matrices to bf16 (biases / LN params stay f32).
    w_in = params["w_in"].astype(jnp.float32)                              # (3E, E)
    b_in = params["b_in"].astype(jnp.float32)                              # (3E,)
    w_in_scaled = jnp.concatenate([w_in[:E] * scale, w_in[E:]], axis=0)
    w_in_t = w_in_scaled.T.astype(jnp.bfloat16)                            # (E, 3E)
    b_in_s = jnp.concatenate([b_in[:E] * scale, b_in[E:]]).reshape(1, 3 * E)
    w_out_t = params["w_out"].astype(jnp.float32).T.astype(jnp.bfloat16)   # (E, E)
    b_out = params["b_out"].astype(jnp.float32).reshape(1, E)
    gamma = params["gamma"].astype(jnp.float32).reshape(1, E)
    beta = params["beta"].astype(jnp.float32).reshape(1, E)

    # Per-generation VMEM budgeting.
    vmem_cap = _vmem_capacity_bytes()                      # 64 MiB v7x, 128 MiB v5e/v6e
    vmem_cap_scoped = (vmem_cap * 7) // 8                  # headroom for compiler scratch/spills
    block_budget = (12 << 20) if vmem_cap <= (64 << 20) else (20 << 20)

    if batch_block is None:
        batch_block = _auto_batch_block(N, L, E, D, block_budget)
    assert N % batch_block == 0
    grid = (N // batch_block,)
    BL = batch_block * L

    # Weights are double-buffered by the pipeline (constant index_map); include
    # them plus slack in the scoped limit, capped per generation.
    wgt_bytes = 2 * ((3 * E * E + E * E) * 2 + 8 * E * 4)
    vmem_limit = min(vmem_cap_scoped,
                     max(32 << 20,
                         _block_work_bytes(batch_block, L, E, D) + wgt_bytes + (12 << 20)))

    kernel = functools.partial(_mhsa_kernel, num_heads=num_heads)

    return pl.pallas_call(
        kernel,
        out_shape=jax.ShapeDtypeStruct((N, L, E), x_nle.dtype),
        grid_spec=pltpu.PrefetchScalarGridSpec(
            num_scalar_prefetch=0,
            grid=grid,
            in_specs=[
                pl.BlockSpec((batch_block, L, E), lambda b: (b, 0, 0)),   # x
                pl.BlockSpec((E, 3 * E), lambda b: (0, 0)),               # W_in^T (bf16)
                pl.BlockSpec((1, 3 * E), lambda b: (0, 0)),               # b_in
                pl.BlockSpec((E, E), lambda b: (0, 0)),                   # W_out^T (bf16)
                pl.BlockSpec((1, E), lambda b: (0, 0)),                   # b_out
                pl.BlockSpec((1, E), lambda b: (0, 0)),                   # gamma
                pl.BlockSpec((1, E), lambda b: (0, 0)),                   # beta
            ],
            out_specs=pl.BlockSpec((batch_block, L, E), lambda b: (b, 0, 0)),
            scratch_shapes=[
                pltpu.VMEM((BL, 3 * E), jnp.float32),     # fused QKV result
                pltpu.VMEM((BL, E), jnp.bfloat16),        # per-head context accumulator
            ],
        ),
        compiler_params=pltpu.CompilerParams(
            dimension_semantics=("parallel",),
            vmem_limit_bytes=int(vmem_limit)),
    )(x_nle, w_in_t, b_in_s, w_out_t, b_out, gamma, beta)


def mhsa_block_torch_layout(x_lne, params, *, num_heads, batch_block=None):
    """Drop-in for PyTorch's (L, N, E) layout.  Prefer `mhsa_block` (batch-first)
    in a pipeline: each boundary transpose here is a full extra HBM pass."""
    out = mhsa_block(jnp.transpose(x_lne, (1, 0, 2)), params,
                     num_heads=num_heads, batch_block=batch_block)
    return jnp.transpose(out, (1, 0, 2))


def _reference(x_nle, params, *, num_heads):
    """Pure-JAX f32 reference of the same forward (eval-mode MHA + LayerNorm)."""
    N, L, E = x_nle.shape
    D = E // num_heads
    x = x_nle
    w_in, b_in = params["w_in"], params["b_in"]
    q = x @ w_in[:E].T + b_in[:E]
    k = x @ w_in[E:2 * E].T + b_in[E:2 * E]
    v = x @ w_in[2 * E:].T + b_in[2 * E:]

    def split(t):  # (N, L, E) -> (N, H, L, D)
        return jnp.transpose(t.reshape(N, L, num_heads, D), (0, 2, 1, 3))

    qh, kh, vh = split(q), split(k), split(v)
    s = jnp.einsum("nhld,nhmd->nhlm", qh, kh) / math.sqrt(D)
    p = jax.nn.softmax(s, axis=-1)
    o = jnp.einsum("nhlm,nhmd->nhld", p, vh)
    o = jnp.transpose(o, (0, 2, 1, 3)).reshape(N, L, E)
    attn_out = o @ params["w_out"].T + params["b_out"]
    y = x + attn_out
    mu = jnp.mean(y, axis=-1, keepdims=True)
    var = jnp.mean((y - mu) ** 2, axis=-1, keepdims=True)
    return (y - mu) * jax.lax.rsqrt(var + 1e-5) * params["gamma"] + params["beta"]


if __name__ == "__main__":
    # Small ViT-like shapes: batch=2, seq=8 tokens, embed=32, heads=4.
    N, L, E, H = 2, 8, 32, 4

    key = jax.random.PRNGKey(0)
    k_x, k_win, k_bin, k_wout, k_bout = jax.random.split(key, 5)

    x = jax.random.normal(k_x, (N, L, E), dtype=jnp.float32)

    params = {
        "w_in":  0.1 * jax.random.normal(k_win, (3 * E, E), dtype=jnp.float32),
        "b_in":  0.1 * jax.random.normal(k_bin, (3 * E,), dtype=jnp.float32),
        "w_out": 0.1 * jax.random.normal(k_wout, (E, E), dtype=jnp.float32),
        "b_out": 0.1 * jax.random.normal(k_bout, (E,), dtype=jnp.float32),
        "gamma": jnp.ones((E,), dtype=jnp.float32),
        "beta":  jnp.zeros((E,), dtype=jnp.float32),
    }

    fwd = jax.jit(lambda xx, pp: mhsa_block(xx, pp, num_heads=H))
    out = jax.block_until_ready(fwd(x, params))

    ref = jax.block_until_ready(_reference(x, params, num_heads=H))
    # bf16 matmul operands -> looser tolerance than a pure f32 path.
    np.testing.assert_allclose(np.asarray(out), np.asarray(ref), atol=3e-2, rtol=3e-2)

    print("KERNEL_OK")
</pallas_src>

<mosaic_0001>
module attributes {stable_mosaic.version = 11 : i64} {
  func.func @_mhsa_kernel(%arg0: i32, %arg1: memref<1x8x32xf32, #tpu.memory_space<vmem>>, %arg2: memref<32x96xbf16, #tpu.memory_space<vmem>>, %arg3: memref<1x96xf32, #tpu.memory_space<vmem>>, %arg4: memref<32x32xbf16, #tpu.memory_space<vmem>>, %arg5: memref<1x32xf32, #tpu.memory_space<vmem>>, %arg6: memref<1x32xf32, #tpu.memory_space<vmem>>, %arg7: memref<1x32xf32, #tpu.memory_space<vmem>>, %arg8: memref<1x8x32xf32, #tpu.memory_space<vmem>>, %arg9: memref<8x96xf32, #tpu.memory_space<vmem>>, %arg10: memref<8x32xbf16, #tpu.memory_space<vmem>>) attributes {dimension_semantics = [#tpu.dimension_semantics<parallel>], iteration_bounds = array<i64: 2>, scalar_prefetch = 0 : i64, scratch_operands = 2 : i64, tpu.core_type = #tpu.core_type<tc>, window_params = [{transform_indices = @transform_0, window_bounds = array<i64: 1, 8, 32>}, {pipeline_mode = #tpu.pipeline_mode<synchronous>, transform_indices = @transform_1, window_bounds = array<i64: 32, 96>}, {pipeline_mode = #tpu.pipeline_mode<synchronous>, transform_indices = @transform_2, window_bounds = array<i64: 1, 96>}, {pipeline_mode = #tpu.pipeline_mode<synchronous>, transform_indices = @transform_3, window_bounds = array<i64: 32, 32>}, {pipeline_mode = #tpu.pipeline_mode<synchronous>, transform_indices = @transform_4, window_bounds = array<i64: 1, 32>}, {pipeline_mode = #tpu.pipeline_mode<synchronous>, transform_indices = @transform_5, window_bounds = array<i64: 1, 32>}, {pipeline_mode = #tpu.pipeline_mode<synchronous>, transform_indices = @transform_6, window_bounds = array<i64: 1, 32>}, {transform_indices = @transform_7, window_bounds = array<i64: 1, 8, 32>}]} {
    %c0 = arith.constant 0 : index
    %c0_0 = arith.constant 0 : index
    %c0_1 = arith.constant 0 : index
    %0 = vector.load %arg1[%c0, %c0_0, %c0_1] : memref<1x8x32xf32, #tpu.memory_space<vmem>>, vector<1x8x32xf32>
    %1 = vector.shape_cast %0 : vector<1x8x32xf32> to vector<8x32xf32>
    %2 = arith.truncf %1 : vector<8x32xf32> to vector<8x32xbf16>
    %c0_2 = arith.constant 0 : index
    %c0_3 = arith.constant 0 : index
    %3 = vector.load %arg2[%c0_2, %c0_3] : memref<32x96xbf16, #tpu.memory_space<vmem>>, vector<32x96xbf16>
    %cst = arith.constant dense<0.000000e+00> : vector<8x96xf32>
    %4 = tpu.matmul %2, %3, %cst {dimension_numbers = #tpu.dot_dimension_numbers<[1], [0], [0], [1], [0, 0, 1, 1], [], []>} : vector<8x32xbf16>, vector<32x96xbf16>, vector<8x96xf32> -> vector<8x96xf32>
    %c0_4 = arith.constant 0 : index
    %c0_5 = arith.constant 0 : index
    %5 = vector.load %arg3[%c0_4, %c0_5] : memref<1x96xf32, #tpu.memory_space<vmem>>, vector<1x96xf32>
    %6 = vector.broadcast %5 : vector<1x96xf32> to vector<8x96xf32>
    %7 = arith.addf %4, %6 : vector<8x96xf32>
    %c0_6 = arith.constant 0 : index
    %c0_7 = arith.constant 0 : index
    %8 = vector.load %arg9[%c0_6, %c0_7] : memref<8x96xf32, #tpu.memory_space<vmem>>, vector<8x96xf32>
    tpu.vector_store %arg9[%c0_6, %c0_7], %7 {strides = array<i32>} : memref<8x96xf32, #tpu.memory_space<vmem>>, vector<8x96xf32>,
    %c0_8 = arith.constant 0 : index
    %c0_9 = arith.constant 0 : index
    %9 = vector.load %arg9[%c0_8, %c0_9] : memref<8x96xf32, #tpu.memory_space<vmem>>, vector<8x8xf32>
    %10 = arith.truncf %9 : vector<8x8xf32> to vector<8x8xbf16>
    %11 = vector.shape_cast %10 : vector<8x8xbf16> to vector<1x8x8xbf16>
    %c0_10 = arith.constant 0 : index
    %c32 = arith.constant 32 : index
    %12 = vector.load %arg9[%c0_10, %c32] : memref<8x96xf32, #tpu.memory_space<vmem>>, vector<8x8xf32>
    %13 = arith.truncf %12 : vector<8x8xf32> to vector<8x8xbf16>
    %14 = vector.shape_cast %13 : vector<8x8xbf16> to vector<1x8x8xbf16>
    %c0_11 = arith.constant 0 : index
    %c64 = arith.constant 64 : index
    %15 = vector.load %arg9[%c0_11, %c64] : memref<8x96xf32, #tpu.memory_space<vmem>>, vector<8x8xf32>
    %16 = arith.truncf %15 : vector<8x8xf32> to vector<8x8xbf16>
    %17 = vector.shape_cast %16 : vector<8x8xbf16> to vector<1x8x8xbf16>
    "tpu.trace_start"() <{level = 10 : i32, message = "bld,bmd->blm"}> : () -> ()
    %cst_12 = arith.constant dense<0.000000e+00> : vector<1x8x8xf32>
    %18 = tpu.matmul %11, %14, %cst_12 {dimension_numbers = #tpu.dot_dimension_numbers<[2], [2], [1], [1], [0, 0, 0, 1, 1, 1], [0], [0]>} : vector<1x8x8xbf16>, vector<1x8x8xbf16>, vector<1x8x8xf32> -> vector<1x8x8xf32>
    "tpu.trace_stop"() : () -> ()
    %cst_13 = arith.constant dense<0xFF800000> : vector<1x8xf32>
    %19 = vector.multi_reduction <maximumf>, %18, %cst_13 [2] : vector<1x8x8xf32> to vector<1x8xf32>
    %20 = vector.shape_cast %19 : vector<1x8xf32> to vector<1x8x1xf32>
    %21 = vector.broadcast %20 : vector<1x8x1xf32> to vector<1x8x8xf32>
    %22 = arith.subf %18, %21 : vector<1x8x8xf32>
    %23 = math.exp %22 : vector<1x8x8xf32>
    %cst_14 = arith.constant dense<0.000000e+00> : vector<1x8xf32>
    %24 = vector.multi_reduction <add>, %23, %cst_14 [2] : vector<1x8x8xf32> to vector<1x8xf32>
    %25 = vector.shape_cast %24 : vector<1x8xf32> to vector<1x8x1xf32>
    %26 = tpu.reciprocal %25 : vector<1x8x1xf32> -> vector<1x8x1xf32>
    %27 = vector.broadcast %26 : vector<1x8x1xf32> to vector<1x8x8xf32>
    %28 = arith.mulf %23, %27 : vector<1x8x8xf32>
    %29 = arith.truncf %28 : vector<1x8x8xf32> to vector<1x8x8xbf16>
    "tpu.trace_start"() <{level = 10 : i32, message = "blm,bmd->bld"}> : () -> ()
    %cst_15 = arith.constant dense<0.000000e+00> : vector<1x8x8xf32>
    %30 = tpu.matmul %29, %17, %cst_15 {dimension_numbers = #tpu.dot_dimension_numbers<[2], [1], [1], [2], [0, 0, 0, 1, 1, 2], [0], [0]>} : vector<1x8x8xbf16>, vector<1x8x8xbf16>, vector<1x8x8xf32> -> vector<1x8x8xf32>
    "tpu.trace_stop"() : () -> ()
    %31 = vector.shape_cast %30 : vector<1x8x8xf32> to vector<8x8xf32>
    %32 = arith.truncf %31 : vector<8x8xf32> to vector<8x8xbf16>
    %c0_16 = arith.constant 0 : index
    %c0_17 = arith.constant 0 : index
    %33 = vector.load %arg10[%c0_16, %c0_17] : memref<8x32xbf16, #tpu.memory_space<vmem>>, vector<8x8xbf16>
    tpu.vector_store %arg10[%c0_16, %c0_17], %32 {strides = array<i32>} : memref<8x32xbf16, #tpu.memory_space<vmem>>, vector<8x8xbf16>,
    %c0_18 = arith.constant 0 : index
    %c8 = arith.constant 8 : index
    %34 = vector.load %arg9[%c0_18, %c8] : memref<8x96xf32, #tpu.memory_space<vmem>>, vector<8x8xf32>
    %35 = arith.truncf %34 : vector<8x8xf32> to vector<8x8xbf16>
    %36 = vector.shape_cast %35 : vector<8x8xbf16> to vector<1x8x8xbf16>
    %c0_19 = arith.constant 0 : index
    %c40 = arith.constant 40 : index
    %37 = vector.load %arg9[%c0_19, %c40] : memref<8x96xf32, #tpu.memory_space<vmem>>, vector<8x8xf32>
    %38 = arith.truncf %37 : vector<8x8xf32> to vector<8x8xbf16>
    %39 = vector.shape_cast %38 : vector<8x8xbf16> to vector<1x8x8xbf16>
    %c0_20 = arith.constant 0 : index
    %c72 = arith.constant 72 : index
    %40 = vector.load %arg9[%c0_20, %c72] : memref<8x96xf32, #tpu.memory_space<vmem>>, vector<8x8xf32>
    %41 = arith.truncf %40 : vector<8x8xf32> to vector<8x8xbf16>
    %42 = vector.shape_cast %41 : vector<8x8xbf16> to vector<1x8x8xbf16>
    "tpu.trace_start"() <{level = 10 : i32, message = "bld,bmd->blm"}> : () -> ()
    %cst_21 = arith.constant dense<0.000000e+00> : vector<1x8x8xf32>
    %43 = tpu.matmul %36, %39, %cst_21 {dimension_numbers = #tpu.dot_dimension_numbers<[2], [2], [1], [1], [0, 0, 0, 1, 1, 1], [0], [0]>} : vector<1x8x8xbf16>, vector<1x8x8xbf16>, vector<1x8x8xf32> -> vector<1x8x8xf32>
    "tpu.trace_stop"() : () -> ()
    %cst_22 = arith.constant dense<0xFF800000> : vector<1x8xf32>
    %44 = vector.multi_reduction <maximumf>, %43, %cst_22 [2] : vector<1x8x8xf32> to vector<1x8xf32>
    %45 = vector.shape_cast %44 : vector<1x8xf32> to vector<1x8x1xf32>
    %46 = vector.broadcast %45 : vector<1x8x1xf32> to vector<1x8x8xf32>
    %47 = arith.subf %43, %46 : vector<1x8x8xf32>
    %48 = math.exp %47 : vector<1x8x8xf32>
    %cst_23 = arith.constant dense<0.000000e+00> : vector<1x8xf32>
    %49 = vector.multi_reduction <add>, %48, %cst_23 [2] : vector<1x8x8xf32> to vector<1x8xf32>
    %50 = vector.shape_cast %49 : vector<1x8xf32> to vector<1x8x1xf32>
    %51 = tpu.reciprocal %50 : vector<1x8x1xf32> -> vector<1x8x1xf32>
    %52 = vector.broadcast %51 : vector<1x8x1xf32> to vector<1x8x8xf32>
    %53 = arith.mulf %48, %52 : vector<1x8x8xf32>
    %54 = arith.truncf %53 : vector<1x8x8xf32> to vector<1x8x8xbf16>
    "tpu.trace_start"() <{level = 10 : i32, message = "blm,bmd->bld"}> : () -> ()
    %cst_24 = arith.constant dense<0.000000e+00> : vector<1x8x8xf32>
    %55 = tpu.matmul %54, %42, %cst_24 {dimension_numbers = #tpu.dot_dimension_numbers<[2], [1], [1], [2], [0, 0, 0, 1, 1, 2], [0], [0]>} : vector<1x8x8xbf16>, vector<1x8x8xbf16>, vector<1x8x8xf32> -> vector<1x8x8xf32>
    "tpu.trace_stop"() : () -> ()
    %56 = vector.shape_cast %55 : vector<1x8x8xf32> to vector<8x8xf32>
    %57 = arith.truncf %56 : vector<8x8xf32> to vector<8x8xbf16>
    %c0_25 = arith.constant 0 : index
    %c8_26 = arith.constant 8 : index
    %58 = vector.load %arg10[%c0_25, %c8_26] : memref<8x32xbf16, #tpu.memory_space<vmem>>, vector<8x8xbf16>
    tpu.vector_store %arg10[%c0_25, %c8_26], %57 {strides = array<i32>} : memref<8x32xbf16, #tpu.memory_space<vmem>>, vector<8x8xbf16>,
    %c0_27 = arith.constant 0 : index
    %c16 = arith.constant 16 : index
    %59 = vector.load %arg9[%c0_27, %c16] : memref<8x96xf32, #tpu.memory_space<vmem>>, vector<8x8xf32>
    %60 = arith.truncf %59 : vector<8x8xf32> to vector<8x8xbf16>
    %61 = vector.shape_cast %60 : vector<8x8xbf16> to vector<1x8x8xbf16>
    %c0_28 = arith.constant 0 : index
    %c48 = arith.constant 48 : index
    %62 = vector.load %arg9[%c0_28, %c48] : memref<8x96xf32, #tpu.memory_space<vmem>>, vector<8x8xf32>
    %63 = arith.truncf %62 : vector<8x8xf32> to vector<8x8xbf16>
    %64 = vector.shape_cast %63 : vector<8x8xbf16> to vector<1x8x8xbf16>
    %c0_29 = arith.constant 0 : index
    %c80 = arith.constant 80 : index
    %65 = vector.load %arg9[%c0_29, %c80] : memref<8x96xf32, #tpu.memory_space<vmem>>, vector<8x8xf32>
    %66 = arith.truncf %65 : vector<8x8xf32> to vector<8x8xbf16>
    %67 = vector.shape_cast %66 : vector<8x8xbf16> to vector<1x8x8xbf16>
    "tpu.trace_start"() <{level = 10 : i32, message = "bld,bmd->blm"}> : () -> ()
    %cst_30 = arith.constant dense<0.000000e+00> : vector<1x8x8xf32>
    %68 = tpu.matmul %61, %64, %cst_30 {dimension_numbers = #tpu.dot_dimension_numbers<[2], [2], [1], [1], [0, 0, 0, 1, 1, 1], [0], [0]>} : vector<1x8x8xbf16>, vector<1x8x8xbf16>, vector<1x8x8xf32> -> vector<1x8x8xf32>
    "tpu.trace_stop"() : () -> ()
    %cst_31 = arith.constant dense<0xFF800000> : vector<1x8xf32>
    %69 = vector.multi_reduction <maximumf>, %68, %cst_31 [2] : vector<1x8x8xf32> to vector<1x8xf32>
    %70 = vector.shape_cast %69 : vector<1x8xf32> to vector<1x8x1xf32>
    %71 = vector.broadcast %70 : vector<1x8x1xf32> to vector<1x8x8xf32>
    %72 = arith.subf %68, %71 : vector<1x8x8xf32>
    %73 = math.exp %72 : vector<1x8x8xf32>
    %cst_32 = arith.constant dense<0.000000e+00> : vector<1x8xf32>
    %74 = vector.multi_reduction <add>, %73, %cst_32 [2] : vector<1x8x8xf32> to vector<1x8xf32>
    %75 = vector.shape_cast %74 : vector<1x8xf32> to vector<1x8x1xf32>
    %76 = tpu.reciprocal %75 : vector<1x8x1xf32> -> vector<1x8x1xf32>
    %77 = vector.broadcast %76 : vector<1x8x1xf32> to vector<1x8x8xf32>
    %78 = arith.mulf %73, %77 : vector<1x8x8xf32>
    %79 = arith.truncf %78 : vector<1x8x8xf32> to vector<1x8x8xbf16>
    "tpu.trace_start"() <{level = 10 : i32, message = "blm,bmd->bld"}> : () -> ()
    %cst_33 = arith.constant dense<0.000000e+00> : vector<1x8x8xf32>
    %80 = tpu.matmul %79, %67, %cst_33 {dimension_numbers = #tpu.dot_dimension_numbers<[2], [1], [1], [2], [0, 0, 0, 1, 1, 2], [0], [0]>} : vector<1x8x8xbf16>, vector<1x8x8xbf16>, vector<1x8x8xf32> -> vector<1x8x8xf32>
    "tpu.trace_stop"() : () -> ()
    %81 = vector.shape_cast %80 : vector<1x8x8xf32> to vector<8x8xf32>
    %82 = arith.truncf %81 : vector<8x8xf32> to vector<8x8xbf16>
    %c0_34 = arith.constant 0 : index
    %c16_35 = arith.constant 16 : index
    %83 = vector.load %arg10[%c0_34, %c16_35] : memref<8x32xbf16, #tpu.memory_space<vmem>>, vector<8x8xbf16>
    tpu.vector_store %arg10[%c0_34, %c16_35], %82 {strides = array<i32>} : memref<8x32xbf16, #tpu.memory_space<vmem>>, vector<8x8xbf16>,
    %c0_36 = arith.constant 0 : index
    %c24 = arith.constant 24 : index
    %84 = vector.load %arg9[%c0_36, %c24] : memref<8x96xf32, #tpu.memory_space<vmem>>, vector<8x8xf32>
    %85 = arith.truncf %84 : vector<8x8xf32> to vector<8x8xbf16>
    %86 = vector.shape_cast %85 : vector<8x8xbf16> to vector<1x8x8xbf16>
    %c0_37 = arith.constant 0 : index
    %c56 = arith.constant 56 : index
    %87 = vector.load %arg9[%c0_37, %c56] : memref<8x96xf32, #tpu.memory_space<vmem>>, vector<8x8xf32>
    %88 = arith.truncf %87 : vector<8x8xf32> to vector<8x8xbf16>
    %89 = vector.shape_cast %88 : vector<8x8xbf16> to vector<1x8x8xbf16>
    %c0_38 = arith.constant 0 : index
    %c88 = arith.constant 88 : index
    %90 = vector.load %arg9[%c0_38, %c88] : memref<8x96xf32, #tpu.memory_space<vmem>>, vector<8x8xf32>
    %91 = arith.truncf %90 : vector<8x8xf32> to vector<8x8xbf16>
    %92 = vector.shape_cast %91 : vector<8x8xbf16> to vector<1x8x8xbf16>
    "tpu.trace_start"() <{level = 10 : i32, message = "bld,bmd->blm"}> : () -> ()
    %cst_39 = arith.constant dense<0.000000e+00> : vector<1x8x8xf32>
    %93 = tpu.matmul %86, %89, %cst_39 {dimension_numbers = #tpu.dot_dimension_numbers<[2], [2], [1], [1], [0, 0, 0, 1, 1, 1], [0], [0]>} : vector<1x8x8xbf16>, vector<1x8x8xbf16>, vector<1x8x8xf32> -> vector<1x8x8xf32>
    "tpu.trace_stop"() : () -> ()
    %cst_40 = arith.constant dense<0xFF800000> : vector<1x8xf32>
    %94 = vector.multi_reduction <maximumf>, %93, %cst_40 [2] : vector<1x8x8xf32> to vector<1x8xf32>
    %95 = vector.shape_cast %94 : vector<1x8xf32> to vector<1x8x1xf32>
    %96 = vector.broadcast %95 : vector<1x8x1xf32> to vector<1x8x8xf32>
    %97 = arith.subf %93, %96 : vector<1x8x8xf32>
    %98 = math.exp %97 : vector<1x8x8xf32>
    %cst_41 = arith.constant dense<0.000000e+00> : vector<1x8xf32>
    %99 = vector.multi_reduction <add>, %98, %cst_41 [2] : vector<1x8x8xf32> to vector<1x8xf32>
    %100 = vector.shape_cast %99 : vector<1x8xf32> to vector<1x8x1xf32>
    %101 = tpu.reciprocal %100 : vector<1x8x1xf32> -> vector<1x8x1xf32>
    %102 = vector.broadcast %101 : vector<1x8x1xf32> to vector<1x8x8xf32>
    %103 = arith.mulf %98, %102 : vector<1x8x8xf32>
    %104 = arith.truncf %103 : vector<1x8x8xf32> to vector<1x8x8xbf16>
    "tpu.trace_start"() <{level = 10 : i32, message = "blm,bmd->bld"}> : () -> ()
    %cst_42 = arith.constant dense<0.000000e+00> : vector<1x8x8xf32>
    %105 = tpu.matmul %104, %92, %cst_42 {dimension_numbers = #tpu.dot_dimension_numbers<[2], [1], [1], [2], [0, 0, 0, 1, 1, 2], [0], [0]>} : vector<1x8x8xbf16>, vector<1x8x8xbf16>, vector<1x8x8xf32> -> vector<1x8x8xf32>
    "tpu.trace_stop"() : () -> ()
    %106 = vector.shape_cast %105 : vector<1x8x8xf32> to vector<8x8xf32>
    %107 = arith.truncf %106 : vector<8x8xf32> to vector<8x8xbf16>
    %c0_43 = arith.constant 0 : index
    %c24_44 = arith.constant 24 : index
    %108 = vector.load %arg10[%c0_43, %c24_44] : memref<8x32xbf16, #tpu.memory_space<vmem>>, vector<8x8xbf16>
    tpu.vector_store %arg10[%c0_43, %c24_44], %107 {strides = array<i32>} : memref<8x32xbf16, #tpu.memory_space<vmem>>, vector<8x8xbf16>,
    %c0_45 = arith.constant 0 : index
    %c0_46 = arith.constant 0 : index
    %109 = vector.load %arg10[%c0_45, %c0_46] : memref<8x32xbf16, #tpu.memory_space<vmem>>, vector<8x32xbf16>
    %c0_47 = arith.constant 0 : index
    %c0_48 = arith.constant 0 : index
    %110 = vector.load %arg4[%c0_47, %c0_48] : memref<32x32xbf16, #tpu.memory_space<vmem>>, vector<32x32xbf16>
    %cst_49 = arith.constant dense<0.000000e+00> : vector<8x32xf32>
    %111 = tpu.matmul %109, %110, %cst_49 {dimension_numbers = #tpu.dot_dimension_numbers<[1], [0], [0], [1], [0, 0, 1, 1], [], []>} : vector<8x32xbf16>, vector<32x32xbf16>, vector<8x32xf32> -> vector<8x32xf32>
    %c0_50 = arith.constant 0 : index
    %c0_51 = arith.constant 0 : index
    %c0_52 = arith.constant 0 : index
    %112 = vector.load %arg1[%c0_50, %c0_51, %c0_52] : memref<1x8x32xf32, #tpu.memory_space<vmem>>, vector<1x8x32xf32>
    %113 = vector.shape_cast %112 : vector<1x8x32xf32> to vector<8x32xf32>
    %114 = arith.addf %113, %111 : vector<8x32xf32>
    %c0_53 = arith.constant 0 : index
    %c0_54 = arith.constant 0 : index
    %115 = vector.load %arg5[%c0_53, %c0_54] : memref<1x32xf32, #tpu.memory_space<vmem>>, vector<1x32xf32>
    %116 = vector.broadcast %115 : vector<1x32xf32> to vector<8x32xf32>
    %117 = arith.addf %114, %116 : vector<8x32xf32>
    %cst_55 = arith.constant dense<0.000000e+00> : vector<8xf32>
    %118 = vector.multi_reduction <add>, %117, %cst_55 [1] : vector<8x32xf32> to vector<8xf32>
    %119 = vector.shape_cast %118 : vector<8xf32> to vector<8x1xf32>
    %cst_56 = arith.constant 3.200000e+01 : f32
    %120 = vector.broadcast %cst_56 : f32 to vector<8x1xf32>
    %121 = arith.divf %119, %120 : vector<8x1xf32>
    %122 = vector.broadcast %121 : vector<8x1xf32> to vector<8x32xf32>
    %123 = arith.subf %117, %122 : vector<8x32xf32>
    %124 = arith.mulf %123, %123 : vector<8x32xf32>
    %cst_57 = arith.constant dense<0.000000e+00> : vector<8xf32>
    %125 = vector.multi_reduction <add>, %124, %cst_57 [1] : vector<8x32xf32> to vector<8xf32>
    %126 = vector.shape_cast %125 : vector<8xf32> to vector<8x1xf32>
    %cst_58 = arith.constant 3.200000e+01 : f32
    %127 = vector.broadcast %cst_58 : f32 to vector<8x1xf32>
    %128 = arith.divf %126, %127 : vector<8x1xf32>
    %129 = vector.broadcast %121 : vector<8x1xf32> to vector<8x32xf32>
    %130 = arith.subf %117, %129 : vector<8x32xf32>
    %cst_59 = arith.constant 9.99999974E-6 : f32
    %131 = vector.broadcast %cst_59 : f32 to vector<8x1xf32>
    %132 = arith.addf %128, %131 : vector<8x1xf32>
    %133 = math.rsqrt %132 : vector<8x1xf32>
    %134 = vector.broadcast %133 : vector<8x1xf32> to vector<8x32xf32>
    %135 = arith.mulf %130, %134 : vector<8x32xf32>
    %c0_60 = arith.constant 0 : index
    %c0_61 = arith.constant 0 : index
    %136 = vector.load %arg6[%c0_60, %c0_61] : memref<1x32xf32, #tpu.memory_space<vmem>>, vector<1x32xf32>
    %137 = vector.broadcast %136 : vector<1x32xf32> to vector<8x32xf32>
    %138 = arith.mulf %135, %137 : vector<8x32xf32>
    %c0_62 = arith.constant 0 : index
    %c0_63 = arith.constant 0 : index
    %139 = vector.load %arg7[%c0_62, %c0_63] : memref<1x32xf32, #tpu.memory_space<vmem>>, vector<1x32xf32>
    %140 = vector.broadcast %139 : vector<1x32xf32> to vector<8x32xf32>
    %141 = arith.addf %138, %140 : vector<8x32xf32>
    %142 = vector.shape_cast %141 : vector<8x32xf32> to vector<1x8x32xf32>
    %c0_64 = arith.constant 0 : index
    %c0_65 = arith.constant 0 : index
    %c0_66 = arith.constant 0 : index
    %143 = vector.load %arg8[%c0_64, %c0_65, %c0_66] : memref<1x8x32xf32, #tpu.memory_space<vmem>>, vector<1x8x32xf32>
    tpu.vector_store %arg8[%c0_64, %c0_65, %c0_66], %142 {strides = array<i32>} : memref<1x8x32xf32, #tpu.memory_space<vmem>>, vector<1x8x32xf32>,
    return
  }
  func.func @transform_0(%arg0: i32) -> (i32, i32, i32) {
    %c0_i32 = arith.constant 0 : i32
    %c0_i32_0 = arith.constant 0 : i32
    %c0_i32_1 = arith.constant 0 : i32
    return %arg0, %c0_i32, %c0_i32_0 : i32, i32, i32
  }
  func.func @transform_1(%arg0: i32) -> (i32, i32) {
    %c0_i32 = arith.constant 0 : i32
    %c0_i32_0 = arith.constant 0 : i32
    %c0_i32_1 = arith.constant 0 : i32
    return %c0_i32, %c0_i32_0 : i32, i32
  }
  func.func @transform_2(%arg0: i32) -> (i32, i32) {
    %c0_i32 = arith.constant 0 : i32
    %c0_i32_0 = arith.constant 0 : i32
    %c0_i32_1 = arith.constant 0 : i32
    return %c0_i32, %c0_i32_0 : i32, i32
  }
  func.func @transform_3(%arg0: i32) -> (i32, i32) {
    %c0_i32 = arith.constant 0 : i32
    %c0_i32_0 = arith.constant 0 : i32
    %c0_i32_1 = arith.constant 0 : i32
    return %c0_i32, %c0_i32_0 : i32, i32
  }
  func.func @transform_4(%arg0: i32) -> (i32, i32) {
    %c0_i32 = arith.constant 0 : i32
    %c0_i32_0 = arith.constant 0 : i32
    %c0_i32_1 = arith.constant 0 : i32
    return %c0_i32, %c0_i32_0 : i32, i32
  }
  func.func @transform_5(%arg0: i32) -> (i32, i32) {
    %c0_i32 = arith.constant 0 : i32
    %c0_i32_0 = arith.constant 0 : i32
    %c0_i32_1 = arith.constant 0 : i32
    return %c0_i32, %c0_i32_0 : i32, i32
  }
  func.func @transform_6(%arg0: i32) -> (i32, i32) {
    %c0_i32 = arith.constant 0 : i32
    %c0_i32_0 = arith.constant 0 : i32
    %c0_i32_1 = arith.constant 0 : i32
    return %c0_i32, %c0_i32_0 : i32, i32
  }
  func.func @transform_7(%arg0: i32) -> (i32, i32, i32) {
    %c0_i32 = arith.constant 0 : i32
    %c0_i32_0 = arith.constant 0 : i32
    %c0_i32_1 = arith.constant 0 : i32
    return %arg0, %c0_i32, %c0_i32_0 : i32, i32, i32
  }
}

</mosaic_0001>

<llo_original>
// kernel: _lambda_.1
$region0: #{_lambda_.1}
  #allocation0 [shape = 'u32[]', space=smem, size = 0x4, offset = 0x4, fixed_abs, tag = 'smem constant byte address 0x4 - core index']
  #allocation1 [shape = 'u32[144,128]{1,0:T(1,128)}', space=vmem, size = 0x12000, scoped, tag = 'internal scratch']
  #allocation2 [shape = 'f32[8,96]{1,0:T(8,128)}', space=vmem, size = 0x1000, scoped, tag = 'scratch operand']
  #allocation3 [shape = 'bf16[8,32]{1,0:T(8,128)(2,1)}', space=vmem, size = 0x800, scoped, tag = 'scratch operand']
  %s0 = inlined_call_operand.vmem [shape: f32[2,8,32], index: 0, kind: input, shape index: {}]
  %s1 = inlined_call_operand.vmem [shape: bf16[32,96], index: 1, kind: input, shape index: {}]
  %s2 = inlined_call_operand.vmem [shape: f32[1,96], index: 2, kind: input, shape index: {}]
  %s3 = inlined_call_operand.vmem [shape: bf16[32,32], index: 3, kind: input, shape index: {}]
  %s4 = inlined_call_operand.vmem [shape: f32[1,32], index: 4, kind: input, shape index: {}]
  %s5 = inlined_call_operand.vmem [shape: f32[1,32], index: 5, kind: input, shape index: {}]
  %s6 = inlined_call_operand.vmem [shape: f32[1,32], index: 6, kind: input, shape index: {}]
  %s7 = inlined_call_operand.hbm [shape: f32[2,8,32], index: 7, kind: output, shape index: {}]
  %s8 = sld [smem:[#allocation0]]
  $region61: #{_lambda_.1} parent=0
    _
  %s10 = ssub.s32 1, %s8
  %s11 = scalar_select 0, %s10, %s8
  $region1: #{_lambda_.1} parent=0
    #allocation4 [shape = 'u8[8192]{0}', space=vmem, size = 0x2000, scoped, tag = 'output window, operand 0']
    #allocation5 [shape = 's32[2]{0}', space=sflag, size = 0x8, scoped, tag = 'scoped memory for _lambda_.1']
    %12 = vsyncpa [#allocation5], 0
    %s13 = scalar_lea.sflag [#allocation5], 1
    %14 = vsyncpa %s13, 0
    loop: start=0, step=1, limit=4
    $region2: #{_lambda_.1} parent=1 // loop_pre_header
      _
    $region3: #{_lambda_.1} parent=1 // loop_header
      %s16 = sphi 0, %s20
      %p17 = scmp.ge.s32.totalorder %s16, 4
      %s26 = sphi 0, %s28
      %s29 = sphi 0, %s26
      %s30 = sphi 0, %s29
      %s46 = sphi 0, %s30
      %s50 = sphi 0, %s50
      %s52 = sphi 0, %s50
      %s53 = sphi 0, %s52
      %s67 = sphi 0, %s53
      %s71 = sphi 0, %s71
      %s73 = sphi 0, %s71
      %s74 = sphi 0, %s73
      %s88 = sphi 0, %s74
      %s92 = sphi 0, %s92
      %s94 = sphi 0, %s92
      %s95 = sphi 0, %s94
      %s109 = sphi 0, %s95
      %s113 = sphi 0, %s113
      %s115 = sphi 0, %s113
      %s116 = sphi 0, %s115
      %s130 = sphi 0, %s116
      %s134 = sphi 0, %s134
      %s136 = sphi 0, %s134
      %s137 = sphi 0, %s136
      %s151 = sphi 0, %s137
      %s155 = sphi 0, %s155
      %s157 = sphi 0, %s155
      %s158 = sphi 0, %s157
      %s172 = sphi 0, %s158
      %s178 = sphi 0, %s180
      %s181 = sphi 0, %s178
      %s182 = sphi 0, %s181
      %s198 = sphi 0, %s182
    $region4: #{_lambda_.1} parent=1 // loop_header_branch
      %19 = sbr.rel (%p17) target = $region8
    $region5: #{_lambda_.1} parent=1 // loop_body
      %s21 = ssub.s32 %s16, 1
      %s22 = ssub.s32 %s16, 2
      %s23 = sadd.s32 %s16, 1
      %s24 = ssub.s32 %s16, %s23
      %p25 = scmp.eq.s32.totalorder %s24, 0
      %s27 = sadd.s32 %s26, 1
      %s28 = scalar_select %p25, %s26, %s27
      %p31 = pneg %p25
      %p32 = scmp.eq.s32.totalorder %s16, 1
      %p33 = por %p31, %p32
      %p34 = scmp.ne.s32.totalorder %s26, %s29
      %p35 = scmp.eq.s32.totalorder %s16, 0
      %p36 = por %p34, %p35
      %p37 = scmp.ne.s32.totalorder %s26, %s29
      %p38 = scmp.eq.s32.totalorder %s21, 1
      %p39 = por %p37, %p38
      %p40 = scmp.ne.s32.totalorder %s29, %s30
      %p41 = scmp.eq.s32.totalorder %s21, 0
      %p42 = por %p40, %p41
      %p43 = scmp.ne.s32.totalorder %s29, %s30
      %p44 = scmp.eq.s32.totalorder %s22, 1
      %p45 = por %p43, %p44
      %p47 = scmp.ne.s32.totalorder %s30, %s46
      %p48 = scmp.eq.s32.totalorder %s22, 0
      %p49 = por %p47, %p48
      %s51 = sadd.s32 %s50, 1
      %p54 = scmp.eq.s32.totalorder %s16, 1
      %p55 = scmp.ne.s32.totalorder %s50, %s52
      %p56 = scmp.eq.s32.totalorder %s16, 0
      %p57 = por %p55, %p56
      %p58 = scmp.ne.s32.totalorder %s50, %s52
      %p59 = scmp.eq.s32.totalorder %s21, 1
      %p60 = por %p58, %p59
      %p61 = scmp.ne.s32.totalorder %s52, %s53
      %p62 = scmp.eq.s32.totalorder %s21, 0
      %p63 = por %p61, %p62
      %p64 = scmp.ne.s32.totalorder %s52, %s53
      %p65 = scmp.eq.s32.totalorder %s22, 1
      %p66 = por %p64, %p65
      %p68 = scmp.ne.s32.totalorder %s53, %s67
      %p69 = scmp.eq.s32.totalorder %s22, 0
      %p70 = por %p68, %p69
      %s72 = sadd.s32 %s71, 1
      %p75 = scmp.eq.s32.totalorder %s16, 1
      %p76 = scmp.ne.s32.totalorder %s71, %s73
      %p77 = scmp.eq.s32.totalorder %s16, 0
      %p78 = por %p76, %p77
      %p79 = scmp.ne.s32.totalorder %s71, %s73
      %p80 = scmp.eq.s32.totalorder %s21, 1
      %p81 = por %p79, %p80
      %p82 = scmp.ne.s32.totalorder %s73, %s74
      %p83 = scmp.eq.s32.totalorder %s21, 0
      %p84 = por %p82, %p83
      %p85 = scmp.ne.s32.totalorder %s73, %s74
      %p86 = scmp.eq.s32.totalorder %s22, 1
      %p87 = por %p85, %p86
      %p89 = scmp.ne.s32.totalorder %s74, %s88
      %p90 = scmp.eq.s32.totalorder %s22, 0
      %p91 = por %p89, %p90
      %s93 = sadd.s32 %s92, 1
      %p96 = scmp.eq.s32.totalorder %s16, 1
      %p97 = scmp.ne.s32.totalorder %s92, %s94
      %p98 = scmp.eq.s32.totalorder %s16, 0
      %p99 = por %p97, %p98
      %p100 = scmp.ne.s32.totalorder %s92, %s94
      %p101 = scmp.eq.s32.totalorder %s21, 1
      %p102 = por %p100, %p101
      %p103 = scmp.ne.s32.totalorder %s94, %s95
      %p104 = scmp.eq.s32.totalorder %s21, 0
      %p105 = por %p103, %p104
      %p106 = scmp.ne.s32.totalorder %s94, %s95
      %p107 = scmp.eq.s32.totalorder %s22, 1
      %p108 = por %p106, %p107
      %p110 = scmp.ne.s32.totalorder %s95, %s109
      %p111 = scmp.eq.s32.totalorder %s22, 0
      %p112 = por %p110, %p111
      %s114 = sadd.s32 %s113, 1
      %p117 = scmp.eq.s32.totalorder %s16, 1
      %p118 = scmp.ne.s32.totalorder %s113, %s115
      %p119 = scmp.eq.s32.totalorder %s16, 0
      %p120 = por %p118, %p119
      %p121 = scmp.ne.s32.totalorder %s113, %s115
      %p122 = scmp.eq.s32.totalorder %s21, 1
      %p123 = por %p121, %p122
      %p124 = scmp.ne.s32.totalorder %s115, %s116
      %p125 = scmp.eq.s32.totalorder %s21, 0
      %p126 = por %p124, %p125
      %p127 = scmp.ne.s32.totalorder %s115, %s116
      %p128 = scmp.eq.s32.totalorder %s22, 1
      %p129 = por %p127, %p128
      %p131 = scmp.ne.s32.totalorder %s116, %s130
      %p132 = scmp.eq.s32.totalorder %s22, 0
      %p133 = por %p131, %p132
      %s135 = sadd.s32 %s134, 1
      %p138 = scmp.eq.s32.totalorder %s16, 1
      %p139 = scmp.ne.s32.totalorder %s134, %s136
      %p140 = scmp.eq.s32.totalorder %s16, 0
      %p141 = por %p139, %p140
      %p142 = scmp.ne.s32.totalorder %s134, %s136
      %p143 = scmp.eq.s32.totalorder %s21, 1
      %p144 = por %p142, %p143
      %p145 = scmp.ne.s32.totalorder %s136, %s137
      %p146 = scmp.eq.s32.totalorder %s21, 0
      %p147 = por %p145, %p146
      %p148 = scmp.ne.s32.totalorder %s136, %s137
      %p149 = scmp.eq.s32.totalorder %s22, 1
      %p150 = por %p148, %p149
      %p152 = scmp.ne.s32.totalorder %s137, %s151
      %p153 = scmp.eq.s32.totalorder %s22, 0
      %p154 = por %p152, %p153
      %s156 = sadd.s32 %s155, 1
      %p159 = scmp.eq.s32.totalorder %s16, 1
      %p160 = scmp.ne.s32.totalorder %s155, %s157
      %p161 = scmp.eq.s32.totalorder %s16, 0
      %p162 = por %p160, %p161
      %p163 = scmp.ne.s32.totalorder %s155, %s157
      %p164 = scmp.eq.s32.totalorder %s21, 1
      %p165 = por %p163, %p164
      %p166 = scmp.ne.s32.totalorder %s157, %s158
      %p167 = scmp.eq.s32.totalorder %s21, 0
      %p168 = por %p166, %p167
      %p169 = scmp.ne.s32.totalorder %s157, %s158
      %p170 = scmp.eq.s32.totalorder %s22, 1
      %p171 = por %p169, %p170
      %p173 = scmp.ne.s32.totalorder %s158, %s172
      %p174 = scmp.eq.s32.totalorder %s22, 0
      %p175 = por %p173, %p174
      %s176 = ssub.s32 %s16, %s23
      %p177 = scmp.eq.s32.totalorder %s176, 0
      %s179 = sadd.s32 %s178, 1
      %s180 = scalar_select %p177, %s178, %s179
      %p183 = pneg %p177
      %p184 = scmp.eq.s32.totalorder %s16, 1
      %p185 = por %p183, %p184
      %p186 = scmp.ne.s32.totalorder %s178, %s181
      %p187 = scmp.eq.s32.totalorder %s16, 0
      %p188 = por %p186, %p187
      %p189 = scmp.ne.s32.totalorder %s178, %s181
      %p190 = scmp.eq.s32.totalorder %s21, 1
      %p191 = por %p189, %p190
      %p192 = scmp.ne.s32.totalorder %s181, %s182
      %p193 = scmp.eq.s32.totalorder %s21, 0
      %p194 = por %p192, %p193
      %p195 = scmp.ne.s32.totalorder %s181, %s182
      %p196 = scmp.eq.s32.totalorder %s22, 1
      %p197 = por %p195, %p196
      %p199 = scmp.ne.s32.totalorder %s182, %s198
      %p200 = scmp.eq.s32.totalorder %s22, 0
      %p201 = por %p199, %p200
      %p202 = scmp.le.s32.totalorder 1, %s16
      %p203 = scmp.lt.s32.totalorder %s16, 3
      %p204 = pnand %p202, %p203
      %p205 = pneg %p204
      // Predicated region
      $region9: #{_lambda_.1} parent=5 // pred_check
        _
      $region10: #{_lambda_.1} parent=5 // pred_check_branch
        %207 = sbr.rel (%p204) target = $region12
      $region11: #{_lambda_.1} parent=5 // pred_region
        %s208 = ssub.s32 %s16, 1
        // Predicated region
        $region13: #{_lambda_.1} parent=11 // pred_check
          %p209 = pneg %p63
        $region14: #{_lambda_.1} parent=11 // pred_check_branch
          %211 = sbr.rel (%p209) target = $region16
        $region15: #{_lambda_.1} parent=11 // pred_region
          _
        $region16: #{_lambda_.1} parent=11 // pred_fallthru
          _
        // Predicated region
        $region17: #{_lambda_.1} parent=11 // pred_check
          %p212 = pneg %p84
        $region18: #{_lambda_.1} parent=11 // pred_check_branch
          %214 = sbr.rel (%p212) target = $region20
        $region19: #{_lambda_.1} parent=11 // pred_region
          _
        $region20: #{_lambda_.1} parent=11 // pred_fallthru
          _
        // Predicated region
        $region21: #{_lambda_.1} parent=11 // pred_check
          %p215 = pneg %p105
        $region22: #{_lambda_.1} parent=11 // pred_check_branch
          %217 = sbr.rel (%p215) target = $region24
        $region23: #{_lambda_.1} parent=11 // pred_region
          _
        $region24: #{_lambda_.1} parent=11 // pred_fallthru
          _
        // Predicated region
        $region25: #{_lambda_.1} parent=11 // pred_check
          %p218 = pneg %p126
        $region26: #{_lambda_.1} parent=11 // pred_check_branch
          %220 = sbr.rel (%p218) target = $region28
        $region27: #{_lambda_.1} parent=11 // pred_region
          _
        $region28: #{_lambda_.1} parent=11 // pred_fallthru
          _
        // Predicated region
        $region29: #{_lambda_.1} parent=11 // pred_check
          %p221 = pneg %p147
        $region30: #{_lambda_.1} parent=11 // pred_check_branch
          %223 = sbr.rel (%p221) target = $region32
        $region31: #{_lambda_.1} parent=11 // pred_region
          _
        $region32: #{_lambda_.1} parent=11 // pred_fallthru
          _
        // Predicated region
        $region33: #{_lambda_.1} parent=11 // pred_check
          %p224 = pneg %p168
        $region34: #{_lambda_.1} parent=11 // pred_check_branch
          %226 = sbr.rel (%p224) target = $region36
        $region35: #{_lambda_.1} parent=11 // pred_region
          _
        $region36: #{_lambda_.1} parent=11 // pred_fallthru
          _
      $region12: #{_lambda_.1} parent=5 // pred_fallthru
        _
      %p227 = scmp.lt.s32.totalorder %s16, 2
      // Predicated region
      $region37: #{_lambda_.1} parent=5 // pred_check
        %p228 = pneg %p227
      $region38: #{_lambda_.1} parent=5 // pred_check_branch
        %230 = sbr.rel (%p228) target = $region40
      $region39: #{_lambda_.1} parent=5 // pred_region
        // Predicated region
        $region41: #{_lambda_.1} parent=39 // pred_check
          %p231 = pneg %p36
        $region42: #{_lambda_.1} parent=39 // pred_check_branch
          %233 = sbr.rel (%p231) target = $region44
        $region43: #{_lambda_.1} parent=39 // pred_region
          %p234 = scmp.lt.s32.totalorder %s16, 1
          %s235 = scalar_select %p234, %s16, 1
          %s236 = smul.addr %s235, 8
          %s237 = scalar_lea.vmem %s0, %s236
        $region44: #{_lambda_.1} parent=39 // pred_fallthru
          _
      $region40: #{_lambda_.1} parent=5 // pred_fallthru
        _
      %p238 = scmp.le.s32.totalorder 1, %s16
      %p239 = scmp.lt.s32.totalorder %s16, 3
      %p240 = pnand %p238, %p239
      %p241 = pneg %p240
      // Predicated region
      $region45: #{_lambda_.1} parent=5 // pred_check
        _
      $region46: #{_lambda_.1} parent=5 // pred_check_branch
        %243 = sbr.rel (%p240) target = $region48
      $region47: #{_lambda_.1} parent=5 // pred_region
        %s244 = ssub.s32 %s16, 1
        %p245 = scmp.lt.s32.totalorder %s21, 1
        %s246 = scalar_select %p245, %s21, 1
        %s247 = smul.addr %s246, 8
        %s248 = scalar_lea.vmem %s0, %s247
        %p249 = pneg %p42
        %p250 = pneg %p39
        %p251 = pneg %p63
        %p252 = pneg %p60
        %p253 = pneg %p84
        %p254 = pneg %p81
        %p255 = pneg %p105
        %p256 = pneg %p102
        %p257 = pneg %p126
        %p258 = pneg %p123
        %p259 = pneg %p147
        %p260 = pneg %p144
        %p261 = pneg %p168
        %p262 = pneg %p165
        %p263 = pneg %p194
        %p264 = pneg %p191
        %s265 = sand.u32 %s181, 1
        %s266 = scalar_lea.sflag [#allocation5], %s265
        %s267 = sand.u32 %s181, 1
        %s268 = smul.addr %s267, 8
        %s269 = scalar_lea.vmem [#allocation4], %s268
        %p270 = scmp.lt.s32.totalorder %s21, 1
        %s271 = scalar_select %p270, %s21, 1
        %s272 = smul.addr %s271, 8
        %s273 = scalar_lea.vmem %s0, %s272
        %v275 = vld [vmem:[%s273] sm:$0xff]
        %v276 = vpack.c.bf16 %v275, %v275
        %v277 = vld [vmem:[%s1] sm:$0xf]
        %v278 = vld [vmem:[%s1 + $0x4] sm:$0xf]
        %v279 = vld [vmem:[%s1 + $0x8] sm:$0xf]
        %v280 = vld [vmem:[%s1 + $0xc] sm:$0xf]
        %v281 = vld [vmem:[%s2] sm:$0x1]
        %v283 = vlaneseq
        %v284 = vshrl.u32 %v283, 7
        %v285 = vsub.s32 0, %v284
        %v286 = vrot.slane %v281, %v285
        %v292 = vunpack.c.l.b16 %v277
        %v293 = vunpack.c.l.b16 %v278
        %v294 = vunpack.c.l.b16 %v279
        %v295 = vunpack.c.l.b16 %v280
        %v296 = vpack.c.b16 %v293, %v292
        %v297 = vpack.c.b16 %v295, %v294
        %vm300 = vcmask 261120
        %v302 = vsel %vm300, %v276, 0
        %304 = vmatprep.subr.bf16.mxu0 0
        %305 = vmatpush1.bf16.msra.mxu0 %v296
        %306 = vmatprep.subr.bf16.mxu0 0
        %307 = vmatpush1.bf16.msra.mxu0 %v297
        %308 = vmatprep.subr.bf16.mxu0 0
        %309 = vmatpush1.bf16.msra.mxu0 0
        %310 = vmatprep.subr.bf16.mxu0 0
        %311 = vmatpush1.bf16.msra.mxu0 0
        %312 = vmatprep.subr.bf16.mxu0 0
        %313 = vmatpush1.bf16.msra.mxu0 0
        %314 = vmatprep.subr.bf16.mxu0 0
        %315 = vmatpush1.bf16.msra.mxu0 0
        %316 = vmatprep.subr.bf16.mxu0 0
        %317 = vmatpush1.bf16.msra.mxu0 0
        %318 = vmatprep.subr.bf16.mxu0 0
        %319 = vmatpush1.bf16.msra.mxu0 0
        %320 = vmatprep.subr.bf16.mxu0 0
        %321 = vmatpush1.bf16.msra.mxu0 0
        %322 = vmatprep.subr.bf16.mxu0 0
        %323 = vmatpush1.bf16.msra.mxu0 0
        %324 = vmatprep.subr.bf16.mxu0 0
        %325 = vmatpush1.bf16.msra.mxu0 0
        %326 = vmatprep.subr.bf16.mxu0 0
        %327 = vmatpush1.bf16.msra.mxu0 0
        %328 = vmatprep.subr.bf16.mxu0 0
        %329 = vmatpush1.bf16.msra.mxu0 0
        %330 = vmatprep.subr.bf16.mxu0 0
        %331 = vmatpush1.bf16.msra.mxu0 0
        %332 = vmatprep.subr.bf16.mxu0 0
        %333 = vmatpush1.bf16.msra.mxu0 0
        %334 = vmatprep.subr.bf16.mxu0 0
        %335 = vmatpush1.bf16.msra.mxu0 0
        %336 = vmatprep.mubr.bf16.mxu0 0
        %337 = vmatmul.mubr.bf16.gmra.mrb[0].mxu0 %v302
        %v338 = vpop.f32.mrb[0].mxu0
        %v339 = vadd.f32 %v286, %v338
        %v340 = vpop.f32.mrb[0].mxu0
        %v341 = vpop.f32.mrb[0].mxu0
        %v342 = vpop.f32.mrb[0].mxu0
        %343 = vdwg.mxu0
        %vm344 = vcmask 785408
        %345 = vst.msk [vmem:[#allocation2] sm:$0xff] %vm344, %v339
        %v346 = vld [vmem:[#allocation2] sm:$0xff]
        %v347 = vpack.c.bf16 %v346, %v346
        %349 = vrot.lane.b32.xlu0 %v347, 96
        %v350 = vpop.permute.xlu0 %349
        %vm351 = vcmask 64512
        %v353 = vsel %vm351, %v347, 0
        %v356 = vsel %vm351, %v350, 0
        %358 = vmatprep.subr.bf16.mxu0 0
        %359 = vmatpush1.bf16.xpose.msra.mxu0 %v356
        %360 = vmatprep.subr.bf16.mxu0 0
        %361 = vmatpush1.bf16.xpose.msra.mxu0 0
        %362 = vmatprep.subr.bf16.mxu0 0
        %363 = vmatpush1.bf16.xpose.msra.mxu0 0
        %364 = vmatprep.subr.bf16.mxu0 0
        %365 = vmatpush1.bf16.xpose.msra.mxu0 0
        %366 = vmatprep.subr.bf16.mxu0 0
        %367 = vmatpush1.bf16.xpose.msra.mxu0 0
        %368 = vmatprep.subr.bf16.mxu0 0
        %369 = vmatpush1.bf16.xpose.msra.mxu0 0
        %370 = vmatprep.subr.bf16.mxu0 0
        %371 = vmatpush1.bf16.xpose.msra.mxu0 0
        %372 = vmatprep.subr.bf16.mxu0 0
        %373 = vmatpush1.bf16.xpose.msra.mxu0 0
        %374 = vmatprep.subr.bf16.mxu0 0
        %375 = vmatpush1.bf16.xpose.msra.mxu0 0
        %376 = vmatprep.subr.bf16.mxu0 0
        %377 = vmatpush1.bf16.xpose.msra.mxu0 0
        %378 = vmatprep.subr.bf16.mxu0 0
        %379 = vmatpush1.bf16.xpose.msra.mxu0 0
        %380 = vmatprep.subr.bf16.mxu0 0
        %381 = vmatpush1.bf16.xpose.msra.mxu0 0
        %382 = vmatprep.subr.bf16.mxu0 0
        %383 = vmatpush1.bf16.xpose.msra.mxu0 0
        %384 = vmatprep.subr.bf16.mxu0 0
        %385 = vmatpush1.bf16.xpose.msra.mxu0 0
        %386 = vmatprep.subr.bf16.mxu0 0
        %387 = vmatpush1.bf16.xpose.msra.mxu0 0
        %388 = vmatprep.subr.bf16.mxu0 0
        %389 = vmatpush1.bf16.xpose.msra.mxu0 0
        %390 = vmatprep.mubr.bf16.mxu0 0
        %391 = vmatmul.mubr.bf16.gmra.mrb[0].mxu0 %v353
        %v392 = vpop.f32.mrb[0].mxu0
        %v393 = vadd.f32 0.0, %v392
        %v394 = vpop.f32.mrb[0].mxu0
        %v395 = vpop.f32.mrb[0].mxu0
        %v396 = vpop.f32.mrb[0].mxu0
        %397 = vdwg.mxu0
        %v398 = vsel %vm351, %v393, -inf
        %399 = vmax.xlane.f32.xlu0 %v398
        %v400 = vpop.xlane.xlu0 %399
        %v401 = vsub.f32 %v393, %v400
        %v402 = vmul.f32 %v401, 1.442695
        %v403 = vpow.pop %v402
        %v404 = vsel %vm351, %v403, 0.0
        %405 = vadd.xlane.f32.xlu0 %v404
        %v406 = vpop.xlane.xlu0 %405
        %v407 = vrcp.pop %v406
        %v408 = vmul.f32 %v403, %v407
        %v409 = vpack.c.bf16 %v408, %v408
        %410 = vrot.lane.b32.xlu0 %v347, 64
        %v411 = vpop.permute.xlu0 %410
        %v413 = vsel %vm351, %v409, 0
        %vm415 = vcmask 1043456
        %v417 = vsel %vm415, %v411, 0
        %419 = vmatprep.subr.bf16.mxu0 0
        %420 = vmatpush1.bf16.msra.mxu0 %v417
        %421 = vmatprep.subr.bf16.mxu0 0
        %422 = vmatpush1.bf16.msra.mxu0 0
        %423 = vmatprep.subr.bf16.mxu0 0
        %424 = vmatpush1.bf16.msra.mxu0 0
        %425 = vmatprep.subr.bf16.mxu0 0
        %426 = vmatpush1.bf16.msra.mxu0 0
        %427 = vmatprep.subr.bf16.mxu0 0
        %428 = vmatpush1.bf16.msra.mxu0 0
        %429 = vmatprep.subr.bf16.mxu0 0
        %430 = vmatpush1.bf16.msra.mxu0 0
        %431 = vmatprep.subr.bf16.mxu0 0
        %432 = vmatpush1.bf16.msra.mxu0 0
        %433 = vmatprep.subr.bf16.mxu0 0
        %434 = vmatpush1.bf16.msra.mxu0 0
        %435 = vmatprep.subr.bf16.mxu0 0
        %436 = vmatpush1.bf16.msra.mxu0 0
        %437 = vmatprep.subr.bf16.mxu0 0
        %438 = vmatpush1.bf16.msra.mxu0 0
        %439 = vmatprep.subr.bf16.mxu0 0
        %440 = vmatpush1.bf16.msra.mxu0 0
        %441 = vmatprep.subr.bf16.mxu0 0
        %442 = vmatpush1.bf16.msra.mxu0 0
        %443 = vmatprep.subr.bf16.mxu0 0
        %444 = vmatpush1.bf16.msra.mxu0 0
        %445 = vmatprep.subr.bf16.mxu0 0
        %446 = vmatpush1.bf16.msra.mxu0 0
        %447 = vmatprep.subr.bf16.mxu0 0
        %448 = vmatpush1.bf16.msra.mxu0 0
        %449 = vmatprep.subr.bf16.mxu0 0
        %450 = vmatpush1.bf16.msra.mxu0 0
        %451 = vmatprep.mubr.bf16.mxu0 0
        %452 = vmatmul.mubr.bf16.gmra.mrb[0].mxu0 %v413
        %v453 = vpop.f32.mrb[0].mxu0
        %v454 = vadd.f32 0.0, %v453
        %v455 = vpop.f32.mrb[0].mxu0
        %v456 = vpop.f32.mrb[0].mxu0
        %v457 = vpop.f32.mrb[0].mxu0
        %458 = vdwg.mxu0
        %v459 = vpack.c.bf16 %v454, %v454
        %vm460 = vcmask 60416
        %461 = vst.msk [vmem:[#allocation3] sm:$0xf] %vm460, %v459
        %v462 = vld [vmem:[#allocation2] sm:$0xff]
        %v463 = vpack.c.bf16 %v462, %v462
        %465 = vrot.lane.b32.xlu0 %v463, 120
        %v466 = vpop.permute.xlu0 %465
        %467 = vrot.lane.b32.xlu0 %v463, 88
        %v468 = vpop.permute.xlu0 %467
        %v470 = vsel %vm351, %v466, 0
        %v473 = vsel %vm351, %v468, 0
        %475 = vmatprep.subr.bf16.mxu0 0
        %476 = vmatpush1.bf16.xpose.msra.mxu0 %v473
        %477 = vmatprep.subr.bf16.mxu0 0
        %478 = vmatpush1.bf16.xpose.msra.mxu0 0
        %479 = vmatprep.subr.bf16.mxu0 0
        %480 = vmatpush1.bf16.xpose.msra.mxu0 0
        %481 = vmatprep.subr.bf16.mxu0 0
        %482 = vmatpush1.bf16.xpose.msra.mxu0 0
        %483 = vmatprep.subr.bf16.mxu0 0
        %484 = vmatpush1.bf16.xpose.msra.mxu0 0
        %485 = vmatprep.subr.bf16.mxu0 0
        %486 = vmatpush1.bf16.xpose.msra.mxu0 0
        %487 = vmatprep.subr.bf16.mxu0 0
        %488 = vmatpush1.bf16.xpose.msra.mxu0 0
        %489 = vmatprep.subr.bf16.mxu0 0
        %490 = vmatpush1.bf16.xpose.msra.mxu0 0
        %491 = vmatprep.subr.bf16.mxu0 0
        %492 = vmatpush1.bf16.xpose.msra.mxu0 0
        %493 = vmatprep.subr.bf16.mxu0 0
        %494 = vmatpush1.bf16.xpose.msra.mxu0 0
        %495 = vmatprep.subr.bf16.mxu0 0
        %496 = vmatpush1.bf16.xpose.msra.mxu0 0
        %497 = vmatprep.subr.bf16.mxu0 0
        %498 = vmatpush1.bf16.xpose.msra.mxu0 0
        %499 = vmatprep.subr.bf16.mxu0 0
        %500 = vmatpush1.bf16.xpose.msra.mxu0 0
        %501 = vmatprep.subr.bf16.mxu0 0
        %502 = vmatpush1.bf16.xpose.msra.mxu0 0
        %503 = vmatprep.subr.bf16.mxu0 0
        %504 = vmatpush1.bf16.xpose.msra.mxu0 0
        %505 = vmatprep.subr.bf16.mxu0 0
        %506 = vmatpush1.bf16.xpose.msra.mxu0 0
        %507 = vmatprep.mubr.bf16.mxu0 0
        %508 = vmatmul.mubr.bf16.gmra.mrb[0].mxu0 %v470
        %v509 = vpop.f32.mrb[0].mxu0
        %v510 = vadd.f32 0.0, %v509
        %v511 = vpop.f32.mrb[0].mxu0
        %v512 = vpop.f32.mrb[0].mxu0
        %v513 = vpop.f32.mrb[0].mxu0
        %514 = vdwg.mxu0
        %v515 = vsel %vm351, %v510, -inf
        %516 = vmax.xlane.f32.xlu0 %v515
        %v517 = vpop.xlane.xlu0 %516
        %v518 = vsub.f32 %v510, %v517
        %v519 = vmul.f32 %v518, 1.442695
        %v520 = vpow.pop %v519
        %v521 = vsel %vm351, %v520, 0.0
        %522 = vadd.xlane.f32.xlu0 %v521
        %v523 = vpop.xlane.xlu0 %522
        %v524 = vrcp.pop %v523
        %v525 = vmul.f32 %v520, %v524
        %v526 = vpack.c.bf16 %v525, %v525
        %527 = vrot.lane.b32.xlu0 %v463, 56
        %v528 = vpop.permute.xlu0 %527
        %v530 = vsel %vm351, %v526, 0
        %v533 = vsel %vm415, %v528, 0
        %535 = vmatprep.subr.bf16.mxu0 0
        %536 = vmatpush1.bf16.msra.mxu0 %v533
        %537 = vmatprep.subr.bf16.mxu0 0
        %538 = vmatpush1.bf16.msra.mxu0 0
        %539 = vmatprep.subr.bf16.mxu0 0
        %540 = vmatpush1.bf16.msra.mxu0 0
        %541 = vmatprep.subr.bf16.mxu0 0
        %542 = vmatpush1.bf16.msra.mxu0 0
        %543 = vmatprep.subr.bf16.mxu0 0
        %544 = vmatpush1.bf16.msra.mxu0 0
        %545 = vmatprep.subr.bf16.mxu0 0
        %546 = vmatpush1.bf16.msra.mxu0 0
        %547 = vmatprep.subr.bf16.mxu0 0
        %548 = vmatpush1.bf16.msra.mxu0 0
        %549 = vmatprep.subr.bf16.mxu0 0
        %550 = vmatpush1.bf16.msra.mxu0 0
        %551 = vmatprep.subr.bf16.mxu0 0
        %552 = vmatpush1.bf16.msra.mxu0 0
        %553 = vmatprep.subr.bf16.mxu0 0
        %554 = vmatpush1.bf16.msra.mxu0 0
        %555 = vmatprep.subr.bf16.mxu0 0
        %556 = vmatpush1.bf16.msra.mxu0 0
        %557 = vmatprep.subr.bf16.mxu0 0
        %558 = vmatpush1.bf16.msra.mxu0 0
        %559 = vmatprep.subr.bf16.mxu0 0
        %560 = vmatpush1.bf16.msra.mxu0 0
        %561 = vmatprep.subr.bf16.mxu0 0
        %562 = vmatpush1.bf16.msra.mxu0 0
        %563 = vmatprep.subr.bf16.mxu0 0
        %564 = vmatpush1.bf16.msra.mxu0 0
        %565 = vmatprep.subr.bf16.mxu0 0
        %566 = vmatpush1.bf16.msra.mxu0 0
        %567 = vmatprep.mubr.bf16.mxu0 0
        %568 = vmatmul.mubr.bf16.gmra.mrb[0].mxu0 %v530
        %v569 = vpop.f32.mrb[0].mxu0
        %v570 = vadd.f32 0.0, %v569
        %v571 = vpop.f32.mrb[0].mxu0
        %v572 = vpop.f32.mrb[0].mxu0
        %v573 = vpop.f32.mrb[0].mxu0
        %574 = vdwg.mxu0
        %v575 = vpack.c.bf16 %v570, %v570
        %v577 = vunpack.c.l.b16 %v575
        %v578 = vpack.c.b16 %v577, %v577
        %579 = vrot.lane.b32.xlu0 %v578, 8
        %v580 = vpop.permute.xlu0 %579
        %vm582 = vcmask 126016
        %583 = vst.msk [vmem:[#allocation3] sm:$0xf] %vm582, %v580
        %v584 = vld [vmem:[#allocation2] sm:$0xff]
        %v585 = vpack.c.bf16 %v584, %v584
        %587 = vrot.lane.b32.xlu0 %v585, 112
        %v588 = vpop.permute.xlu0 %587
        %589 = vrot.lane.b32.xlu0 %v585, 80
        %v590 = vpop.permute.xlu0 %589
        %v592 = vsel %vm351, %v588, 0
        %v595 = vsel %vm351, %v590, 0
        %597 = vmatprep.subr.bf16.mxu0 0
        %598 = vmatpush1.bf16.xpose.msra.mxu0 %v595
        %599 = vmatprep.subr.bf16.mxu0 0
        %600 = vmatpush1.bf16.xpose.msra.mxu0 0
        %601 = vmatprep.subr.bf16.mxu0 0
        %602 = vmatpush1.bf16.xpose.msra.mxu0 0
        %603 = vmatprep.subr.bf16.mxu0 0
        %604 = vmatpush1.bf16.xpose.msra.mxu0 0
        %605 = vmatprep.subr.bf16.mxu0 0
        %606 = vmatpush1.bf16.xpose.msra.mxu0 0
        %607 = vmatprep.subr.bf16.mxu0 0
        %608 = vmatpush1.bf16.xpose.msra.mxu0 0
        %609 = vmatprep.subr.bf16.mxu0 0
        %610 = vmatpush1.bf16.xpose.msra.mxu0 0
        %611 = vmatprep.subr.bf16.mxu0 0
        %612 = vmatpush1.bf16.xpose.msra.mxu0 0
        %613 = vmatprep.subr.bf16.mxu0 0
        %614 = vmatpush1.bf16.xpose.msra.mxu0 0
        %615 = vmatprep.subr.bf16.mxu0 0
        %616 = vmatpush1.bf16.xpose.msra.mxu0 0
        %617 = vmatprep.subr.bf16.mxu0 0
        %618 = vmatpush1.bf16.xpose.msra.mxu0 0
        %619 = vmatprep.subr.bf16.mxu0 0
        %620 = vmatpush1.bf16.xpose.msra.mxu0 0
        %621 = vmatprep.subr.bf16.mxu0 0
        %622 = vmatpush1.bf16.xpose.msra.mxu0 0
        %623 = vmatprep.subr.bf16.mxu0 0
        %624 = vmatpush1.bf16.xpose.msra.mxu0 0
        %625 = vmatprep.subr.bf16.mxu0 0
        %626 = vmatpush1.bf16.xpose.msra.mxu0 0
        %627 = vmatprep.subr.bf16.mxu0 0
        %628 = vmatpush1.bf16.xpose.msra.mxu0 0
        %629 = vmatprep.mubr.bf16.mxu0 0
        %630 = vmatmul.mubr.bf16.gmra.mrb[0].mxu0 %v592
        %v631 = vpop.f32.mrb[0].mxu0
        %v632 = vadd.f32 0.0, %v631
        %v633 = vpop.f32.mrb[0].mxu0
        %v634 = vpop.f32.mrb[0].mxu0
        %v635 = vpop.f32.mrb[0].mxu0
        %636 = vdwg.mxu0
        %v637 = vsel %vm351, %v632, -inf
        %638 = vmax.xlane.f32.xlu0 %v637
        %v639 = vpop.xlane.xlu0 %638
        %v640 = vsub.f32 %v632, %v639
        %v641 = vmul.f32 %v640, 1.442695
        %v642 = vpow.pop %v641
        %v643 = vsel %vm351, %v642, 0.0
        %644 = vadd.xlane.f32.xlu0 %v643
        %v645 = vpop.xlane.xlu0 %644
        %v646 = vrcp.pop %v645
        %v647 = vmul.f32 %v642, %v646
        %v648 = vpack.c.bf16 %v647, %v647
        %649 = vrot.lane.b32.xlu0 %v585, 48
        %v650 = vpop.permute.xlu0 %649
        %v652 = vsel %vm351, %v648, 0
        %v655 = vsel %vm415, %v650, 0
        %657 = vmatprep.subr.bf16.mxu0 0
        %658 = vmatpush1.bf16.msra.mxu0 %v655
        %659 = vmatprep.subr.bf16.mxu0 0
        %660 = vmatpush1.bf16.msra.mxu0 0
        %661 = vmatprep.subr.bf16.mxu0 0
        %662 = vmatpush1.bf16.msra.mxu0 0
        %663 = vmatprep.subr.bf16.mxu0 0
        %664 = vmatpush1.bf16.msra.mxu0 0
        %665 = vmatprep.subr.bf16.mxu0 0
        %666 = vmatpush1.bf16.msra.mxu0 0
        %667 = vmatprep.subr.bf16.mxu0 0
        %668 = vmatpush1.bf16.msra.mxu0 0
        %669 = vmatprep.subr.bf16.mxu0 0
        %670 = vmatpush1.bf16.msra.mxu0 0
        %671 = vmatprep.subr.bf16.mxu0 0
        %672 = vmatpush1.bf16.msra.mxu0 0
        %673 = vmatprep.subr.bf16.mxu0 0
        %674 = vmatpush1.bf16.msra.mxu0 0
        %675 = vmatprep.subr.bf16.mxu0 0
        %676 = vmatpush1.bf16.msra.mxu0 0
        %677 = vmatprep.subr.bf16.mxu0 0
        %678 = vmatpush1.bf16.msra.mxu0 0
        %679 = vmatprep.subr.bf16.mxu0 0
        %680 = vmatpush1.bf16.msra.mxu0 0
        %681 = vmatprep.subr.bf16.mxu0 0
        %682 = vmatpush1.bf16.msra.mxu0 0
        %683 = vmatprep.subr.bf16.mxu0 0
        %684 = vmatpush1.bf16.msra.mxu0 0
        %685 = vmatprep.subr.bf16.mxu0 0
        %686 = vmatpush1.bf16.msra.mxu0 0
        %687 = vmatprep.subr.bf16.mxu0 0
        %688 = vmatpush1.bf16.msra.mxu0 0
        %689 = vmatprep.mubr.bf16.mxu0 0
        %690 = vmatmul.mubr.bf16.gmra.mrb[0].mxu0 %v652
        %v691 = vpop.f32.mrb[0].mxu0
        %v692 = vadd.f32 0.0, %v691
        %v693 = vpop.f32.mrb[0].mxu0
        %v694 = vpop.f32.mrb[0].mxu0
        %v695 = vpop.f32.mrb[0].mxu0
        %696 = vdwg.mxu0
        %v697 = vpack.c.bf16 %v692, %v692
        %v699 = vunpack.c.l.b16 %v697
        %v700 = vpack.c.b16 %v699, %v699
        %701 = vrot.lane.b32.xlu0 %v700, 16
        %v702 = vpop.permute.xlu0 %701
        %vm704 = vcmask 191616
        %705 = vst.msk [vmem:[#allocation3] sm:$0xf] %vm704, %v702
        %v706 = vld [vmem:[#allocation2] sm:$0xff]
        %v707 = vpack.c.bf16 %v706, %v706
        %709 = vrot.lane.b32.xlu0 %v707, 104
        %v710 = vpop.permute.xlu0 %709
        %711 = vrot.lane.b32.xlu0 %v707, 72
        %v712 = vpop.permute.xlu0 %711
        %v714 = vsel %vm351, %v710, 0
        %v717 = vsel %vm351, %v712, 0
        %719 = vmatprep.subr.bf16.mxu0 0
        %720 = vmatpush1.bf16.xpose.msra.mxu0 %v717
        %721 = vmatprep.subr.bf16.mxu0 0
        %722 = vmatpush1.bf16.xpose.msra.mxu0 0
        %723 = vmatprep.subr.bf16.mxu0 0
        %724 = vmatpush1.bf16.xpose.msra.mxu0 0
        %725 = vmatprep.subr.bf16.mxu0 0
        %726 = vmatpush1.bf16.xpose.msra.mxu0 0
        %727 = vmatprep.subr.bf16.mxu0 0
        %728 = vmatpush1.bf16.xpose.msra.mxu0 0
        %729 = vmatprep.subr.bf16.mxu0 0
        %730 = vmatpush1.bf16.xpose.msra.mxu0 0
        %731 = vmatprep.subr.bf16.mxu0 0
        %732 = vmatpush1.bf16.xpose.msra.mxu0 0
        %733 = vmatprep.subr.bf16.mxu0 0
        %734 = vmatpush1.bf16.xpose.msra.mxu0 0
        %735 = vmatprep.subr.bf16.mxu0 0
        %736 = vmatpush1.bf16.xpose.msra.mxu0 0
        %737 = vmatprep.subr.bf16.mxu0 0
        %738 = vmatpush1.bf16.xpose.msra.mxu0 0
        %739 = vmatprep.subr.bf16.mxu0 0
        %740 = vmatpush1.bf16.xpose.msra.mxu0 0
        %741 = vmatprep.subr.bf16.mxu0 0
        %742 = vmatpush1.bf16.xpose.msra.mxu0 0
        %743 = vmatprep.subr.bf16.mxu0 0
        %744 = vmatpush1.bf16.xpose.msra.mxu0 0
        %745 = vmatprep.subr.bf16.mxu0 0
        %746 = vmatpush1.bf16.xpose.msra.mxu0 0
        %747 = vmatprep.subr.bf16.mxu0 0
        %748 = vmatpush1.bf16.xpose.msra.mxu0 0
        %749 = vmatprep.subr.bf16.mxu0 0
        %750 = vmatpush1.bf16.xpose.msra.mxu0 0
        %751 = vmatprep.mubr.bf16.mxu0 0
        %752 = vmatmul.mubr.bf16.gmra.mrb[0].mxu0 %v714
        %v753 = vpop.f32.mrb[0].mxu0
        %v754 = vadd.f32 0.0, %v753
        %v755 = vpop.f32.mrb[0].mxu0
        %v756 = vpop.f32.mrb[0].mxu0
        %v757 = vpop.f32.mrb[0].mxu0
        %758 = vdwg.mxu0
        %v759 = vsel %vm351, %v754, -inf
        %760 = vmax.xlane.f32.xlu0 %v759
        %v761 = vpop.xlane.xlu0 %760
        %v762 = vsub.f32 %v754, %v761
        %v763 = vmul.f32 %v762, 1.442695
        %v764 = vpow.pop %v763
        %v765 = vsel %vm351, %v764, 0.0
        %766 = vadd.xlane.f32.xlu0 %v765
        %v767 = vpop.xlane.xlu0 %766
        %v768 = vrcp.pop %v767
        %v769 = vmul.f32 %v764, %v768
        %v770 = vpack.c.bf16 %v769, %v769
        %771 = vrot.lane.b32.xlu0 %v707, 40
        %v772 = vpop.permute.xlu0 %771
        %v774 = vsel %vm351, %v770, 0
        %v777 = vsel %vm415, %v772, 0
        %779 = vmatprep.subr.bf16.mxu0 0
        %780 = vmatpush1.bf16.msra.mxu0 %v777
        %781 = vmatprep.subr.bf16.mxu0 0
        %782 = vmatpush1.bf16.msra.mxu0 0
        %783 = vmatprep.subr.bf16.mxu0 0
        %784 = vmatpush1.bf16.msra.mxu0 0
        %785 = vmatprep.subr.bf16.mxu0 0
        %786 = vmatpush1.bf16.msra.mxu0 0
        %787 = vmatprep.subr.bf16.mxu0 0
        %788 = vmatpush1.bf16.msra.mxu0 0
        %789 = vmatprep.subr.bf16.mxu0 0
        %790 = vmatpush1.bf16.msra.mxu0 0
        %791 = vmatprep.subr.bf16.mxu0 0
        %792 = vmatpush1.bf16.msra.mxu0 0
        %793 = vmatprep.subr.bf16.mxu0 0
        %794 = vmatpush1.bf16.msra.mxu0 0
        %795 = vmatprep.subr.bf16.mxu0 0
        %796 = vmatpush1.bf16.msra.mxu0 0
        %797 = vmatprep.subr.bf16.mxu0 0
        %798 = vmatpush1.bf16.msra.mxu0 0
        %799 = vmatprep.subr.bf16.mxu0 0
        %800 = vmatpush1.bf16.msra.mxu0 0
        %801 = vmatprep.subr.bf16.mxu0 0
        %802 = vmatpush1.bf16.msra.mxu0 0
        %803 = vmatprep.subr.bf16.mxu0 0
        %804 = vmatpush1.bf16.msra.mxu0 0
        %805 = vmatprep.subr.bf16.mxu0 0
        %806 = vmatpush1.bf16.msra.mxu0 0
        %807 = vmatprep.subr.bf16.mxu0 0
        %808 = vmatpush1.bf16.msra.mxu0 0
        %809 = vmatprep.subr.bf16.mxu0 0
        %810 = vmatpush1.bf16.msra.mxu0 0
        %811 = vmatprep.mubr.bf16.mxu0 0
        %812 = vmatmul.mubr.bf16.gmra.mrb[0].mxu0 %v774
        %v813 = vpop.f32.mrb[0].mxu0
        %v814 = vadd.f32 0.0, %v813
        %v815 = vpop.f32.mrb[0].mxu0
        %v816 = vpop.f32.mrb[0].mxu0
        %v817 = vpop.f32.mrb[0].mxu0
        %818 = vdwg.mxu0
        %v819 = vpack.c.bf16 %v814, %v814
        %v821 = vunpack.c.l.b16 %v819
        %v822 = vpack.c.b16 %v821, %v821
        %823 = vrot.lane.b32.xlu0 %v822, 24
        %v824 = vpop.permute.xlu0 %823
        %vm826 = vcmask 257216
        %827 = vst.msk [vmem:[#allocation3] sm:$0xf] %vm826, %v824
        %v828 = vld [vmem:[#allocation3] sm:$0xf]
        %v829 = vld [vmem:[%s3] sm:$0xf]
        %v830 = vld [vmem:[%s3 + $0x4] sm:$0xf]
        %v831 = vld [vmem:[%s3 + $0x8] sm:$0xf]
        %v832 = vld [vmem:[%s3 + $0xc] sm:$0xf]
        %v837 = vunpack.c.l.b16 %v829
        %v838 = vunpack.c.l.b16 %v830
        %v839 = vunpack.c.l.b16 %v831
        %v840 = vunpack.c.l.b16 %v832
        %v841 = vpack.c.b16 %v838, %v837
        %v842 = vpack.c.b16 %v840, %v839
        %v846 = vsel %vm300, %v828, 0
        %848 = vmatprep.subr.bf16.mxu0 0
        %849 = vmatpush1.bf16.msra.mxu0 %v841
        %850 = vmatprep.subr.bf16.mxu0 0
        %851 = vmatpush1.bf16.msra.mxu0 %v842
        %852 = vmatprep.subr.bf16.mxu0 0
        %853 = vmatpush1.bf16.msra.mxu0 0
        %854 = vmatprep.subr.bf16.mxu0 0
        %855 = vmatpush1.bf16.msra.mxu0 0
        %856 = vmatprep.subr.bf16.mxu0 0
        %857 = vmatpush1.bf16.msra.mxu0 0
        %858 = vmatprep.subr.bf16.mxu0 0
        %859 = vmatpush1.bf16.msra.mxu0 0
        %860 = vmatprep.subr.bf16.mxu0 0
        %861 = vmatpush1.bf16.msra.mxu0 0
        %862 = vmatprep.subr.bf16.mxu0 0
        %863 = vmatpush1.bf16.msra.mxu0 0
        %864 = vmatprep.subr.bf16.mxu0 0
        %865 = vmatpush1.bf16.msra.mxu0 0
        %866 = vmatprep.subr.bf16.mxu0 0
        %867 = vmatpush1.bf16.msra.mxu0 0
        %868 = vmatprep.subr.bf16.mxu0 0
        %869 = vmatpush1.bf16.msra.mxu0 0
        %870 = vmatprep.subr.bf16.mxu0 0
        %871 = vmatpush1.bf16.msra.mxu0 0
        %872 = vmatprep.subr.bf16.mxu0 0
        %873 = vmatpush1.bf16.msra.mxu0 0
        %874 = vmatprep.subr.bf16.mxu0 0
        %875 = vmatpush1.bf16.msra.mxu0 0
        %876 = vmatprep.subr.bf16.mxu0 0
        %877 = vmatpush1.bf16.msra.mxu0 0
        %878 = vmatprep.subr.bf16.mxu0 0
        %879 = vmatpush1.bf16.msra.mxu0 0
        %880 = vmatprep.mubr.bf16.mxu0 0
        %881 = vmatmul.mubr.bf16.gmra.mrb[0].mxu0 %v846
        %v882 = vpop.f32.mrb[0].mxu0
        %v883 = vadd.f32 0.0, %v882
        %v884 = vpop.f32.mrb[0].mxu0
        %v885 = vpop.f32.mrb[0].mxu0
        %v886 = vpop.f32.mrb[0].mxu0
        %887 = vdwg.mxu0
        %v888 = vld [vmem:[%s273] sm:$0xff]
        %v889 = vadd.f32 %v888, %v883
        %v890 = vld [vmem:[%s4] sm:$0x1]
        %v892 = vlaneseq
        %v893 = vshrl.u32 %v892, 7
        %v894 = vsub.s32 0, %v893
        %v895 = vrot.slane %v890, %v894
        %v897 = vadd.f32 %v889, %v895
        %v898 = vsel %vm300, %v897, 0.0
        %899 = vadd.xlane.f32.xlu0 %v898
        %v900 = vpop.xlane.xlu0 %899
        %v901 = vrcp.pop 32.0
        %v902 = vmul.f32 %v900, %v901
        %v903 = vsub.f32 %v897, %v902
        %v904 = vmul.f32 %v903, %v903
        %v905 = vsel %vm300, %v904, 0.0
        %906 = vadd.xlane.f32.xlu0 %v905
        %v907 = vpop.xlane.xlu0 %906
        %v908 = vmul.f32 %v907, %v901
        %v909 = vadd.f32 %v908, 1e-05
        %v910 = vrsqrt.pop %v909
        %v911 = vmul.f32 %v903, %v910
        %v912 = vld [vmem:[%s5] sm:$0x1]
        %v914 = vlaneseq
        %v915 = vshrl.u32 %v914, 7
        %v916 = vsub.s32 0, %v915
        %v917 = vrot.slane %v912, %v916
        %v919 = vmul.f32 %v911, %v917
        %v920 = vld [vmem:[%s6] sm:$0x1]
        %v922 = vlaneseq
        %v923 = vshrl.u32 %v922, 7
        %v924 = vsub.s32 0, %v923
        %v925 = vrot.slane %v920, %v924
        %v927 = vadd.f32 %v919, %v925
        %928 = vst.msk [vmem:[%s269] sm:$0xff] %vm300, %v927
        %s929 = sand.u32 %s181, 1
        %s930 = scalar_lea.sflag [#allocation5], %s929
        %s931 = sand.u32 %s181, 1
        %s932 = smul.addr %s931, 8
        %s933 = scalar_lea.vmem [#allocation4], %s932
        // Predicated region
        $region49: #{_lambda_.1} parent=47 // pred_check
          %p934 = pneg %p191
        $region50: #{_lambda_.1} parent=47 // pred_check_branch
          %936 = sbr.rel (%p934) target = $region52
        $region51: #{_lambda_.1} parent=47 // pred_region
          %s938 = ssub.s32 128, 128
          %939 = vsyncadd %s930, %s938
          %s940 = smul.addr %s21, 128
          %s941 = scalar_lea.hbm %s7, %s940
          %s943 = sshll.u32 %s933, 4
          %s944 = int_to_ptr.vmem [resolvable:$true] %s943
          %946 = dma.vmem_to_hbm [thread:$0]  %s944, 128, %s941, %s930
        $region52: #{_lambda_.1} parent=47 // pred_fallthru
          _
      $region48: #{_lambda_.1} parent=5 // pred_fallthru
        _
      %p947 = scmp.le.s32.totalorder 2, %s16
      // Predicated region
      $region53: #{_lambda_.1} parent=5 // pred_check
        %p948 = pneg %p947
      $region54: #{_lambda_.1} parent=5 // pred_check_branch
        %950 = sbr.rel (%p948) target = $region56
      $region55: #{_lambda_.1} parent=5 // pred_region
        %s951 = ssub.s32 %s16, 2
        // Predicated region
        $region57: #{_lambda_.1} parent=55 // pred_check
          %p952 = pneg %p197
        $region58: #{_lambda_.1} parent=55 // pred_check_branch
          %954 = sbr.rel (%p952) target = $region60
        $region59: #{_lambda_.1} parent=55 // pred_region
          %s955 = sand.u32 %s182, 1
          %s956 = scalar_lea.sflag [#allocation5], %s955
          %s957 = sand.u32 %s182, 1
          %s958 = smul.addr %s957, 8
          %s959 = scalar_lea.vmem [#allocation4], %s958
          %960 = dma.done %s956, 128
        $region60: #{_lambda_.1} parent=55 // pred_fallthru
          _
      $region56: #{_lambda_.1} parent=5 // pred_fallthru
        _
    $region6: #{_lambda_.1} parent=1 // loop_footer
      %s20 = sadd.s32 1, %s16
    $region7: #{_lambda_.1} parent=1 // loop_footer_branch
      %15 = sbr.rel target = $region3
    $region8: #{_lambda_.1} parent=1 // loop_exit
      _
    %961 = vsyncpa [#allocation5], 1
    %s962 = scalar_lea.sflag [#allocation5], 1
    %963 = vsyncpa %s962, 1

</llo_original>
